<compile_context>
chip_gen: v6e
topology: v6e:2x2x1
jax: 0.10.0
libtpu: 0.0.40
codegen_flags: <defaults>
</compile_context>

<pallas_src>
import math
import functools

import jax
import jax.numpy as jnp
from jax import lax
from jax.experimental import pallas as pl
from jax.experimental.pallas import tpu as pltpu


def rel_attn_kernel(q_ref, k_ref, v_ref, emb_ref, mask_ref, o_ref, *,
                    seq_len, shift, scale):
    # One (batch, head) pair per grid step.
    q = q_ref[0, 0] * scale                              # (L, D), scale folded in
    k = k_ref[0, 0]                                      # (L, D)
    v = v_ref[0, 0]                                      # (L, D)
    emb = emb_ref[...]                                   # (W_pad, D) reversed window
    mask = mask_ref[0, 0].astype(jnp.float32)            # (L, L) additive mask

    # attention_scores = q @ k^T : contract last dims, no explicit .T (MXU).
    scores = lax.dot_general(
        q, k, (((1,), (1,)), ((), ())),
        preferred_element_type=jnp.float32)              # (L, L)

    # relative_position_scores on the MXU:
    #   s_rel[l, j] = q[l] . emb_win_rev[j],  emb_win_rev[j] = emb_weight[P+L-2-j]
    # Row l of the (L, L) result needs column j = r + (L-1) - l, i.e. a per-row
    # lane shift growing by 1 per query row -> strided roll
    # (base shift = (-(L-1)) mod W_pad, stride 1 along the query/sublane axis).
    s_rel = lax.dot_general(
        q, emb, (((1,), (1,)), ((), ())),
        preferred_element_type=jnp.float32)              # (L, W_pad)
    rel = pltpu.roll(s_rel, shift=shift, axis=1,
                     stride=1, stride_axis=0)[:, :seq_len]   # (L, L)

    scores = scores + rel + mask

    # Numerically stable softmax; one approximate reciprocal per row (EUP)
    # instead of an element-wise divide.
    m = jnp.max(scores, axis=-1, keepdims=True)
    e = jnp.exp(scores - m)
    denom = jnp.sum(e, axis=-1, keepdims=True)
    probs = e * pl.reciprocal(denom, approx=True)        # (L, L)

    # context = probs @ v : MXU operands in input dtype, f32 accumulation.
    ctx = lax.dot_general(
        probs.astype(v.dtype), v, (((1,), (0,)), ((), ())),
        preferred_element_type=jnp.float32)              # (L, D)

    # Full (L, D) tile store; lane-dense for realistic D (>= 128).
    o_ref[0, 0] = ctx.astype(o_ref.dtype)


def relative_position_attention(q, k, v, attention_mask, emb_weight,
                                max_position_embeddings):
    """q, k, v: (B, H, L, D); attention_mask: (B, 1, L, L) additive;
    emb_weight: (2*max_position_embeddings - 1, D). Returns (B, H, L, D)."""
    B, H, L, D = q.shape
    P = max_position_embeddings
    if L > P:
        # The torch module would index the embedding out of range here; fail
        # loudly instead of silently clamping.
        raise ValueError(f"seq_len {L} > max_position_embeddings {P}")

    # Only distances |l - r| <= L-1 are reachable: slice the 2L-1 window
    # emb_weight[P-L : P+L-1], reverse it, zero-pad to a lane-friendly width.
    W = 2 * L - 1
    W_pad = max(128, ((W + 127) // 128) * 128)
    emb_win = emb_weight[P - L: P + L - 1]               # (2L-1, D)
    emb_rev = jnp.flip(emb_win, axis=0).astype(q.dtype)  # emb_rev[j] = emb[P+L-2-j]
    emb_rev = jnp.pad(emb_rev, ((0, W_pad - W), (0, 0)))
    shift = (-(L - 1)) % W_pad                           # base roll amount

    kernel = functools.partial(
        rel_attn_kernel, seq_len=L, shift=shift, scale=1.0 / math.sqrt(D))

    return pl.pallas_call(
        kernel,
        out_shape=jax.ShapeDtypeStruct((B, H, L, D), q.dtype),
        grid_spec=pltpu.PrefetchScalarGridSpec(
            num_scalar_prefetch=0,
            grid=(B, H),                                  # b outer, h inner
            in_specs=[
                pl.BlockSpec((1, 1, L, D), lambda b, h: (b, h, 0, 0)),  # q
                pl.BlockSpec((1, 1, L, D), lambda b, h: (b, h, 0, 0)),  # k
                pl.BlockSpec((1, 1, L, D), lambda b, h: (b, h, 0, 0)),  # v
                # emb / mask index_maps are independent of h: blocks stay
                # resident across the H inner iterations (no per-head re-DMA).
                pl.BlockSpec((W_pad, D), lambda b, h: (0, 0)),          # emb
                pl.BlockSpec((1, 1, L, L), lambda b, h: (b, 0, 0, 0)),  # mask
            ],
            out_specs=pl.BlockSpec((1, 1, L, D), lambda b, h: (b, h, 0, 0)),
        ),
        compiler_params=pltpu.CompilerParams(
            dimension_semantics=("parallel", "parallel"),
            vmem_limit_bytes=32 * 1024 * 1024),
    )(q, k, v, emb_rev, attention_mask)


def reference(q, k, v, attention_mask, emb_weight, max_position_embeddings):
    B, H, L, D = q.shape
    scores = jnp.einsum('bhld,bhrd->bhlr', q, k)
    pos = jnp.arange(L)
    distance = pos[:, None] - pos[None, :]
    pe = emb_weight[distance + max_position_embeddings - 1].astype(q.dtype)
    rel = jnp.einsum('bhld,lrd->bhlr', q, pe)
    scores = (scores + rel) / math.sqrt(D)
    scores = scores + attention_mask
    probs = jax.nn.softmax(scores, axis=-1)
    return jnp.einsum('bhlr,bhrd->bhld', probs, v)


if __name__ == "__main__":
    B, H, L = 2, 4, 8
    max_position_embeddings = 16
    hidden_size = 32          # == head dim D (required by the module's einsum)
    D = hidden_size

    key = jax.random.PRNGKey(0)
    kq, kk, kv, kw = jax.random.split(key, 4)
    q = jax.random.normal(kq, (B, H, L, D), dtype=jnp.float32)
    k = jax.random.normal(kk, (B, H, L, D), dtype=jnp.float32)
    v = jax.random.normal(kv, (B, H, L, D), dtype=jnp.float32)

    # Deterministic nn.Embedding(2*max_pos-1, hidden_size) weight.
    emb_weight = jax.random.normal(
        kw, (2 * max_position_embeddings - 1, hidden_size), dtype=jnp.float32)

    # Additive attention mask: batch 0 attends to all 8 keys, batch 1 to first 6.
    lengths = jnp.array([8, 6])
    valid = jnp.arange(L)[None, :] < lengths[:, None]            # (B, L)
    attention_mask = jnp.where(valid, 0.0, -1e9).astype(jnp.float32)
    attention_mask = attention_mask[:, None, None, :] * jnp.ones((1, 1, L, 1))
    attention_mask = attention_mask.astype(jnp.float32)          # (B, 1, L, L)

    out = relative_position_attention(q, k, v, attention_mask, emb_weight,
                                      max_position_embeddings)
    out = jax.block_until_ready(out)

    ref = reference(q, k, v, attention_mask, emb_weight, max_position_embeddings)
    assert out.shape == (B, H, L, D)
    # Slightly looser tolerance: softmax normalization uses the approximate
    # EUP reciprocal (pl.reciprocal(..., approx=True)).
    assert jnp.allclose(out, ref, atol=2e-3, rtol=2e-3), "mismatch vs JAX reference"

    print("KERNEL_OK")
</pallas_src>

<mosaic_0001>
module attributes {stable_mosaic.version = 11 : i64} {
  func.func @rel_attn_kernel(%arg0: i32, %arg1: i32, %arg2: memref<1x1x8x32xf32, #tpu.memory_space<vmem>>, %arg3: memref<1x1x8x32xf32, #tpu.memory_space<vmem>>, %arg4: memref<1x1x8x32xf32, #tpu.memory_space<vmem>>, %arg5: memref<128x32xf32, #tpu.memory_space<vmem>>, %arg6: memref<1x1x8x8xf32, #tpu.memory_space<vmem>>, %arg7: memref<1x1x8x32xf32, #tpu.memory_space<vmem>>) attributes {dimension_semantics = [#tpu.dimension_semantics<parallel>, #tpu.dimension_semantics<parallel>], iteration_bounds = array<i64: 2, 4>, scalar_prefetch = 0 : i64, scratch_operands = 0 : i64, tpu.core_type = #tpu.core_type<tc>, window_params = [{transform_indices = @transform_0, window_bounds = array<i64: 1, 1, 8, 32>}, {transform_indices = @transform_1, window_bounds = array<i64: 1, 1, 8, 32>}, {transform_indices = @transform_2, window_bounds = array<i64: 1, 1, 8, 32>}, {pipeline_mode = #tpu.pipeline_mode<synchronous>, transform_indices = @transform_3, window_bounds = array<i64: 128, 32>}, {transform_indices = @transform_4, window_bounds = array<i64: 1, 1, 8, 8>}, {transform_indices = @transform_5, window_bounds = array<i64: 1, 1, 8, 32>}]} {
    %c0 = arith.constant 0 : index
    %c0_0 = arith.constant 0 : index
    %c0_1 = arith.constant 0 : index
    %c0_2 = arith.constant 0 : index
    %0 = vector.load %arg2[%c0, %c0_0, %c0_1, %c0_2] : memref<1x1x8x32xf32, #tpu.memory_space<vmem>>, vector<1x1x8x32xf32>
    %1 = vector.shape_cast %0 : vector<1x1x8x32xf32> to vector<8x32xf32>
    %cst = arith.constant 0.176776692 : f32
    %2 = vector.broadcast %cst : f32 to vector<8x32xf32>
    %3 = arith.mulf %1, %2 : vector<8x32xf32>
    %c0_3 = arith.constant 0 : index
    %c0_4 = arith.constant 0 : index
    %c0_5 = arith.constant 0 : index
    %c0_6 = arith.constant 0 : index
    %4 = vector.load %arg3[%c0_3, %c0_4, %c0_5, %c0_6] : memref<1x1x8x32xf32, #tpu.memory_space<vmem>>, vector<1x1x8x32xf32>
    %5 = vector.shape_cast %4 : vector<1x1x8x32xf32> to vector<8x32xf32>
    %c0_7 = arith.constant 0 : index
    %c0_8 = arith.constant 0 : index
    %c0_9 = arith.constant 0 : index
    %c0_10 = arith.constant 0 : index
    %6 = vector.load %arg4[%c0_7, %c0_8, %c0_9, %c0_10] : memref<1x1x8x32xf32, #tpu.memory_space<vmem>>, vector<1x1x8x32xf32>
    %7 = vector.shape_cast %6 : vector<1x1x8x32xf32> to vector<8x32xf32>
    %c0_11 = arith.constant 0 : index
    %c0_12 = arith.constant 0 : index
    %8 = vector.load %arg5[%c0_11, %c0_12] : memref<128x32xf32, #tpu.memory_space<vmem>>, vector<128x32xf32>
    %c0_13 = arith.constant 0 : index
    %c0_14 = arith.constant 0 : index
    %c0_15 = arith.constant 0 : index
    %c0_16 = arith.constant 0 : index
    %9 = vector.load %arg6[%c0_13, %c0_14, %c0_15, %c0_16] : memref<1x1x8x8xf32, #tpu.memory_space<vmem>>, vector<1x1x8x8xf32>
    %10 = vector.shape_cast %9 : vector<1x1x8x8xf32> to vector<8x8xf32>
    %cst_17 = arith.constant dense<0.000000e+00> : vector<8x8xf32>
    %11 = tpu.matmul %3, %5, %cst_17 {dimension_numbers = #tpu.dot_dimension_numbers<[1], [1], [0], [0], [0, 0, 1, 0], [], []>} : vector<8x32xf32>, vector<8x32xf32>, vector<8x8xf32> -> vector<8x8xf32>
    %cst_18 = arith.constant dense<0.000000e+00> : vector<8x128xf32>
    %12 = tpu.matmul %3, %8, %cst_18 {dimension_numbers = #tpu.dot_dimension_numbers<[1], [1], [0], [0], [0, 0, 1, 0], [], []>} : vector<8x32xf32>, vector<128x32xf32>, vector<8x128xf32> -> vector<8x128xf32>
    %c121_i32 = arith.constant 121 : i32
    %13 = tpu.dynamic_rotate %12 by %c121_i32 dim 1 {stride = 1 : si32, stride_dimension = 0 : si32} : vector<8x128xf32>, i32 -> vector<8x128xf32>
    %14 = vector.extract_strided_slice %13 {offsets = [0, 0], sizes = [8, 8], strides = [1, 1]} : vector<8x128xf32> to vector<8x8xf32>
    %15 = arith.addf %11, %14 : vector<8x8xf32>
    %16 = arith.addf %15, %10 : vector<8x8xf32>
    %cst_19 = arith.constant dense<0xFF800000> : vector<8xf32>
    %17 = vector.multi_reduction <maximumf>, %16, %cst_19 [1] : vector<8x8xf32> to vector<8xf32>
    %18 = vector.shape_cast %17 : vector<8xf32> to vector<8x1xf32>
    %19 = vector.broadcast %18 : vector<8x1xf32> to vector<8x8xf32>
    %20 = arith.subf %16, %19 : vector<8x8xf32>
    %21 = math.exp %20 : vector<8x8xf32>
    %cst_20 = arith.constant dense<0.000000e+00> : vector<8xf32>
    %22 = vector.multi_reduction <add>, %21, %cst_20 [1] : vector<8x8xf32> to vector<8xf32>
    %23 = vector.shape_cast %22 : vector<8xf32> to vector<8x1xf32>
    %24 = tpu.reciprocal %23 {approx = true} : vector<8x1xf32> -> vector<8x1xf32>
    %25 = vector.broadcast %24 : vector<8x1xf32> to vector<8x8xf32>
    %26 = arith.mulf %21, %25 : vector<8x8xf32>
    %cst_21 = arith.constant dense<0.000000e+00> : vector<8x32xf32>
    %27 = tpu.matmul %26, %7, %cst_21 {dimension_numbers = #tpu.dot_dimension_numbers<[1], [0], [0], [1], [0, 0, 1, 1], [], []>} : vector<8x8xf32>, vector<8x32xf32>, vector<8x32xf32> -> vector<8x32xf32>
    %c0_22 = arith.constant 0 : index
    %c0_23 = arith.constant 0 : index
    %c0_24 = arith.constant 0 : index
    %c0_25 = arith.constant 0 : index
    %28 = vector.load %arg7[%c0_22, %c0_23, %c0_24, %c0_25] : memref<1x1x8x32xf32, #tpu.memory_space<vmem>>, vector<1x1x8x32xf32>
    %29 = vector.shape_cast %28 : vector<1x1x8x32xf32> to vector<8x32xf32>
    %30 = vector.shape_cast %27 : vector<8x32xf32> to vector<1x1x8x32xf32>
    tpu.vector_store %arg7[%c0_22, %c0_23, %c0_24, %c0_25], %30 {strides = array<i32>} : memref<1x1x8x32xf32, #tpu.memory_space<vmem>>, vector<1x1x8x32xf32>,
    return
  }
  func.func @transform_0(%arg0: i32, %arg1: i32) -> (i32, i32, i32, i32) {
    %c0_i32 = arith.constant 0 : i32
    %c0_i32_0 = arith.constant 0 : i32
    %c0_i32_1 = arith.constant 0 : i32
    return %arg0, %arg1, %c0_i32, %c0_i32_0 : i32, i32, i32, i32
  }
  func.func @transform_1(%arg0: i32, %arg1: i32) -> (i32, i32, i32, i32) {
    %c0_i32 = arith.constant 0 : i32
    %c0_i32_0 = arith.constant 0 : i32
    %c0_i32_1 = arith.constant 0 : i32
    return %arg0, %arg1, %c0_i32, %c0_i32_0 : i32, i32, i32, i32
  }
  func.func @transform_2(%arg0: i32, %arg1: i32) -> (i32, i32, i32, i32) {
    %c0_i32 = arith.constant 0 : i32
    %c0_i32_0 = arith.constant 0 : i32
    %c0_i32_1 = arith.constant 0 : i32
    return %arg0, %arg1, %c0_i32, %c0_i32_0 : i32, i32, i32, i32
  }
  func.func @transform_3(%arg0: i32, %arg1: i32) -> (i32, i32) {
    %c0_i32 = arith.constant 0 : i32
    %c0_i32_0 = arith.constant 0 : i32
    %c0_i32_1 = arith.constant 0 : i32
    return %c0_i32, %c0_i32_0 : i32, i32
  }
  func.func @transform_4(%arg0: i32, %arg1: i32) -> (i32, i32, i32, i32) {
    %c0_i32 = arith.constant 0 : i32
    %c0_i32_0 = arith.constant 0 : i32
    %c0_i32_1 = arith.constant 0 : i32
    %c0_i32_2 = arith.constant 0 : i32
    return %arg0, %c0_i32, %c0_i32_0, %c0_i32_1 : i32, i32, i32, i32
  }
  func.func @transform_5(%arg0: i32, %arg1: i32) -> (i32, i32, i32, i32) {
    %c0_i32 = arith.constant 0 : i32
    %c0_i32_0 = arith.constant 0 : i32
    %c0_i32_1 = arith.constant 0 : i32
    return %arg0, %arg1, %c0_i32, %c0_i32_0 : i32, i32, i32, i32
  }
}

</mosaic_0001>

<llo_original>
// kernel: tpu_custom_call.1
$region0: #{tpu_custom_call.1}
  #allocation0 [shape = 'u32[]', space=smem, size = 0x4, offset = 0x4, fixed_abs, tag = 'smem constant byte address 0x4 - core index']
  #allocation1 [shape = 'u32[144,128]{1,0:T(1,128)}', space=vmem, size = 0x12000, scoped, tag = 'internal scratch']
  %s0 = inlined_call_operand.vmem [shape: f32[2,4,8,32], index: 0, kind: input, shape index: {}]
  %s1 = inlined_call_operand.vmem [shape: f32[2,4,8,32], index: 1, kind: input, shape index: {}]
  %s2 = inlined_call_operand.hbm [shape: f32[2,4,8,32], index: 2, kind: input, shape index: {}]
  %s3 = inlined_call_operand.vmem [shape: f32[128,32], index: 3, kind: input, shape index: {}]
  %s4 = inlined_call_operand.vmem [shape: f32[2,1,8,8], index: 4, kind: input, shape index: {}]
  %s5 = inlined_call_operand.hbm [shape: f32[2,4,8,32], index: 5, kind: output, shape index: {}]
  %s6 = sld [smem:[#allocation0]]
  $region57: #{tpu_custom_call.1} parent=0
    _
  %s8 = ssub.s32 1, %s6
  %s9 = scalar_select 0, %s8, %s6
  $region1: #{tpu_custom_call.1} parent=0
    #allocation2 [shape = 'u8[8192]{0}', space=vmem, size = 0x2000, scoped, tag = 'input window, operand 2']
    #allocation3 [shape = 's32[2]{0}', space=sflag, size = 0x8, scoped, tag = 'scoped memory for tpu_custom_call.1']
    #allocation4 [shape = 's32[2]{0}', space=sflag, size = 0x8, scoped, tag = 'scoped memory for tpu_custom_call.1']
    #allocation5 [shape = 'u8[8192]{0}', space=vmem, size = 0x2000, scoped, tag = 'output window, operand 0']
    %10 = vsyncpa [#allocation3], 0
    %s11 = scalar_lea.sflag [#allocation3], 1
    %12 = vsyncpa %s11, 0
    %13 = vsyncpa [#allocation4], 0
    %s14 = scalar_lea.sflag [#allocation4], 1
    %15 = vsyncpa %s14, 0
    loop: start=0, step=1, limit=10
    $region2: #{tpu_custom_call.1} parent=1 // loop_pre_header
      _
    $region3: #{tpu_custom_call.1} parent=1 // loop_header
      %s17 = sphi 0, %s21
      %p18 = scmp.ge.s32.totalorder %s17, 10
      %s24 = sphi 0, %s36
      %s25 = sphi 0, %s32
      %s26 = sphi 0, %s24
      %s27 = sphi 0, %s25
      %s28 = sphi 0, %s26
      %s29 = sphi 0, %s27
      %s41 = sphi 0, %s43
      %s44 = sphi 0, %s41
      %s45 = sphi 0, %s44
      %s61 = sphi 0, %s45
      %s69 = sphi 0, %s71
      %s72 = sphi 0, %s69
      %s73 = sphi 0, %s72
      %s89 = sphi 0, %s73
      %s97 = sphi 0, %s99
      %s100 = sphi 0, %s97
      %s101 = sphi 0, %s100
      %s117 = sphi 0, %s101
      %s121 = sphi 0, %s121
      %s123 = sphi 0, %s121
      %s124 = sphi 0, %s123
      %s138 = sphi 0, %s124
      %s144 = sphi 0, %s146
      %s147 = sphi 0, %s144
      %s148 = sphi 0, %s147
      %s164 = sphi 0, %s148
      %s172 = sphi 0, %s174
      %s175 = sphi 0, %s172
      %s176 = sphi 0, %s175
      %s192 = sphi 0, %s176
    $region4: #{tpu_custom_call.1} parent=1 // loop_header_branch
      %20 = sbr.rel (%p18) target = $region8
    $region5: #{tpu_custom_call.1} parent=1 // loop_body
      %s22 = ssub.s32 %s17, 1
      %s23 = ssub.s32 %s17, 2
      %s30 = sadd.s32 1, %s25
      %p31 = scmp.ge.s32.totalorder %s30, 4
      %s32 = scalar_select %p31, 0, %s30
      %s33 = sadd.s32 1, %s24
      %s34 = scalar_select %p31, %s33, %s24
      %p35 = scmp.ge.s32.totalorder %s34, 2
      %s36 = scalar_select %p35, 0, %s34
      %s37 = ssub.s32 %s24, %s36
      %s38 = ssub.s32 %s25, %s32
      %s39 = sor.u32 %s37, %s38
      %p40 = scmp.eq.s32.totalorder %s39, 0
      %s42 = sadd.s32 %s41, 1
      %s43 = scalar_select %p40, %s41, %s42
      %p46 = pneg %p40
      %p47 = scmp.eq.s32.totalorder %s17, 7
      %p48 = por %p46, %p47
      %p49 = scmp.ne.s32.totalorder %s41, %s44
      %p50 = scmp.eq.s32.totalorder %s17, 0
      %p51 = por %p49, %p50
      %p52 = scmp.ne.s32.totalorder %s41, %s44
      %p53 = scmp.eq.s32.totalorder %s22, 7
      %p54 = por %p52, %p53
      %p55 = scmp.ne.s32.totalorder %s44, %s45
      %p56 = scmp.eq.s32.totalorder %s22, 0
      %p57 = por %p55, %p56
      %p58 = scmp.ne.s32.totalorder %s44, %s45
      %p59 = scmp.eq.s32.totalorder %s23, 7
      %p60 = por %p58, %p59
      %p62 = scmp.ne.s32.totalorder %s45, %s61
      %p63 = scmp.eq.s32.totalorder %s23, 0
      %p64 = por %p62, %p63
      %s65 = ssub.s32 %s24, %s36
      %s66 = ssub.s32 %s25, %s32
      %s67 = sor.u32 %s65, %s66
      %p68 = scmp.eq.s32.totalorder %s67, 0
      %s70 = sadd.s32 %s69, 1
      %s71 = scalar_select %p68, %s69, %s70
      %p74 = pneg %p68
      %p75 = scmp.eq.s32.totalorder %s17, 7
      %p76 = por %p74, %p75
      %p77 = scmp.ne.s32.totalorder %s69, %s72
      %p78 = scmp.eq.s32.totalorder %s17, 0
      %p79 = por %p77, %p78
      %p80 = scmp.ne.s32.totalorder %s69, %s72
      %p81 = scmp.eq.s32.totalorder %s22, 7
      %p82 = por %p80, %p81
      %p83 = scmp.ne.s32.totalorder %s72, %s73
      %p84 = scmp.eq.s32.totalorder %s22, 0
      %p85 = por %p83, %p84
      %p86 = scmp.ne.s32.totalorder %s72, %s73
      %p87 = scmp.eq.s32.totalorder %s23, 7
      %p88 = por %p86, %p87
      %p90 = scmp.ne.s32.totalorder %s73, %s89
      %p91 = scmp.eq.s32.totalorder %s23, 0
      %p92 = por %p90, %p91
      %s93 = ssub.s32 %s24, %s36
      %s94 = ssub.s32 %s25, %s32
      %s95 = sor.u32 %s93, %s94
      %p96 = scmp.eq.s32.totalorder %s95, 0
      %s98 = sadd.s32 %s97, 1
      %s99 = scalar_select %p96, %s97, %s98
      %p102 = pneg %p96
      %p103 = scmp.eq.s32.totalorder %s17, 7
      %p104 = por %p102, %p103
      %p105 = scmp.ne.s32.totalorder %s97, %s100
      %p106 = scmp.eq.s32.totalorder %s17, 0
      %p107 = por %p105, %p106
      %p108 = scmp.ne.s32.totalorder %s97, %s100
      %p109 = scmp.eq.s32.totalorder %s22, 7
      %p110 = por %p108, %p109
      %p111 = scmp.ne.s32.totalorder %s100, %s101
      %p112 = scmp.eq.s32.totalorder %s22, 0
      %p113 = por %p111, %p112
      %p114 = scmp.ne.s32.totalorder %s100, %s101
      %p115 = scmp.eq.s32.totalorder %s23, 7
      %p116 = por %p114, %p115
      %p118 = scmp.ne.s32.totalorder %s101, %s117
      %p119 = scmp.eq.s32.totalorder %s23, 0
      %p120 = por %p118, %p119
      %s122 = sadd.s32 %s121, 1
      %p125 = scmp.eq.s32.totalorder %s17, 7
      %p126 = scmp.ne.s32.totalorder %s121, %s123
      %p127 = scmp.eq.s32.totalorder %s17, 0
      %p128 = por %p126, %p127
      %p129 = scmp.ne.s32.totalorder %s121, %s123
      %p130 = scmp.eq.s32.totalorder %s22, 7
      %p131 = por %p129, %p130
      %p132 = scmp.ne.s32.totalorder %s123, %s124
      %p133 = scmp.eq.s32.totalorder %s22, 0
      %p134 = por %p132, %p133
      %p135 = scmp.ne.s32.totalorder %s123, %s124
      %p136 = scmp.eq.s32.totalorder %s23, 7
      %p137 = por %p135, %p136
      %p139 = scmp.ne.s32.totalorder %s124, %s138
      %p140 = scmp.eq.s32.totalorder %s23, 0
      %p141 = por %p139, %p140
      %s142 = ssub.s32 %s24, %s36
      %p143 = scmp.eq.s32.totalorder %s142, 0
      %s145 = sadd.s32 %s144, 1
      %s146 = scalar_select %p143, %s144, %s145
      %p149 = pneg %p143
      %p150 = scmp.eq.s32.totalorder %s17, 7
      %p151 = por %p149, %p150
      %p152 = scmp.ne.s32.totalorder %s144, %s147
      %p153 = scmp.eq.s32.totalorder %s17, 0
      %p154 = por %p152, %p153
      %p155 = scmp.ne.s32.totalorder %s144, %s147
      %p156 = scmp.eq.s32.totalorder %s22, 7
      %p157 = por %p155, %p156
      %p158 = scmp.ne.s32.totalorder %s147, %s148
      %p159 = scmp.eq.s32.totalorder %s22, 0
      %p160 = por %p158, %p159
      %p161 = scmp.ne.s32.totalorder %s147, %s148
      %p162 = scmp.eq.s32.totalorder %s23, 7
      %p163 = por %p161, %p162
      %p165 = scmp.ne.s32.totalorder %s148, %s164
      %p166 = scmp.eq.s32.totalorder %s23, 0
      %p167 = por %p165, %p166
      %s168 = ssub.s32 %s24, %s36
      %s169 = ssub.s32 %s25, %s32
      %s170 = sor.u32 %s168, %s169
      %p171 = scmp.eq.s32.totalorder %s170, 0
      %s173 = sadd.s32 %s172, 1
      %s174 = scalar_select %p171, %s172, %s173
      %p177 = pneg %p171
      %p178 = scmp.eq.s32.totalorder %s17, 7
      %p179 = por %p177, %p178
      %p180 = scmp.ne.s32.totalorder %s172, %s175
      %p181 = scmp.eq.s32.totalorder %s17, 0
      %p182 = por %p180, %p181
      %p183 = scmp.ne.s32.totalorder %s172, %s175
      %p184 = scmp.eq.s32.totalorder %s22, 7
      %p185 = por %p183, %p184
      %p186 = scmp.ne.s32.totalorder %s175, %s176
      %p187 = scmp.eq.s32.totalorder %s22, 0
      %p188 = por %p186, %p187
      %p189 = scmp.ne.s32.totalorder %s175, %s176
      %p190 = scmp.eq.s32.totalorder %s23, 7
      %p191 = por %p189, %p190
      %p193 = scmp.ne.s32.totalorder %s176, %s192
      %p194 = scmp.eq.s32.totalorder %s23, 0
      %p195 = por %p193, %p194
      %p196 = scmp.le.s32.totalorder 1, %s17
      %p197 = scmp.lt.s32.totalorder %s17, 9
      %p198 = pnand %p196, %p197
      %p199 = pneg %p198
      // Predicated region
      $region9: #{tpu_custom_call.1} parent=5 // pred_check
        _
      $region10: #{tpu_custom_call.1} parent=5 // pred_check_branch
        %201 = sbr.rel (%p198) target = $region12
      $region11: #{tpu_custom_call.1} parent=5 // pred_region
        %s202 = ssub.s32 %s17, 1
        // Predicated region
        $region13: #{tpu_custom_call.1} parent=11 // pred_check
          %p203 = pneg %p134
        $region14: #{tpu_custom_call.1} parent=11 // pred_check_branch
          %205 = sbr.rel (%p203) target = $region16
        $region15: #{tpu_custom_call.1} parent=11 // pred_region
          _
        $region16: #{tpu_custom_call.1} parent=11 // pred_fallthru
          _
      $region12: #{tpu_custom_call.1} parent=5 // pred_fallthru
        _
      %p206 = scmp.lt.s32.totalorder %s17, 8
      // Predicated region
      $region17: #{tpu_custom_call.1} parent=5 // pred_check
        %p207 = pneg %p206
      $region18: #{tpu_custom_call.1} parent=5 // pred_check_branch
        %209 = sbr.rel (%p207) target = $region20
      $region19: #{tpu_custom_call.1} parent=5 // pred_region
        // Predicated region
        $region21: #{tpu_custom_call.1} parent=19 // pred_check
          %p210 = pneg %p51
        $region22: #{tpu_custom_call.1} parent=19 // pred_check_branch
          %212 = sbr.rel (%p210) target = $region24
        $region23: #{tpu_custom_call.1} parent=19 // pred_region
          %p213 = scmp.lt.s32.totalorder %s24, 1
          %s214 = scalar_select %p213, %s24, 1
          %p215 = scmp.lt.s32.totalorder %s25, 3
          %s216 = scalar_select %p215, %s25, 3
          %s217 = smul.addr %s214, 4
          %s218 = sadd.s32 %s216, %s217
          %s219 = smul.addr %s218, 8
          %s220 = scalar_lea.vmem %s0, %s219
        $region24: #{tpu_custom_call.1} parent=19 // pred_fallthru
          _
        // Predicated region
        $region25: #{tpu_custom_call.1} parent=19 // pred_check
          %p221 = pneg %p79
        $region26: #{tpu_custom_call.1} parent=19 // pred_check_branch
          %223 = sbr.rel (%p221) target = $region28
        $region27: #{tpu_custom_call.1} parent=19 // pred_region
          %p224 = scmp.lt.s32.totalorder %s24, 1
          %s225 = scalar_select %p224, %s24, 1
          %p226 = scmp.lt.s32.totalorder %s25, 3
          %s227 = scalar_select %p226, %s25, 3
          %s228 = smul.addr %s225, 4
          %s229 = sadd.s32 %s227, %s228
          %s230 = smul.addr %s229, 8
          %s231 = scalar_lea.vmem %s1, %s230
        $region28: #{tpu_custom_call.1} parent=19 // pred_fallthru
          _
        // Predicated region
        $region29: #{tpu_custom_call.1} parent=19 // pred_check
          %p232 = pneg %p107
        $region30: #{tpu_custom_call.1} parent=19 // pred_check_branch
          %234 = sbr.rel (%p232) target = $region32
        $region31: #{tpu_custom_call.1} parent=19 // pred_region
          %s235 = sand.u32 %s97, 1
          %s236 = scalar_lea.sflag [#allocation3], %s235
          %s237 = sand.u32 %s97, 1
          %s238 = smul.addr %s237, 8
          %s239 = scalar_lea.vmem [#allocation2], %s238
          %s241 = ssub.s32 128, 128
          %242 = vsyncadd %s236, %s241
          %s243 = smul.addr %s24, 4
          %s244 = sadd.s32 %s25, %s243
          %s245 = smul.addr %s244, 128
          %s246 = scalar_lea.hbm %s2, %s245
          %s248 = sshll.u32 %s239, 4
          %s249 = int_to_ptr.vmem [resolvable:$true] %s248
          %251 = dma.hbm_to_vmem [thread:$0]  %s246, 128, %s249, %s236
        $region32: #{tpu_custom_call.1} parent=19 // pred_fallthru
          _
        // Predicated region
        $region33: #{tpu_custom_call.1} parent=19 // pred_check
          %p252 = pneg %p154
        $region34: #{tpu_custom_call.1} parent=19 // pred_check_branch
          %254 = sbr.rel (%p252) target = $region36
        $region35: #{tpu_custom_call.1} parent=19 // pred_region
          %p255 = scmp.lt.s32.totalorder %s24, 1
          %s256 = scalar_select %p255, %s24, 1
          %s257 = smul.addr %s256, 8
          %s258 = scalar_lea.vmem %s4, %s257
        $region36: #{tpu_custom_call.1} parent=19 // pred_fallthru
          _
      $region20: #{tpu_custom_call.1} parent=5 // pred_fallthru
        _
      %p259 = scmp.le.s32.totalorder 1, %s17
      %p260 = scmp.lt.s32.totalorder %s17, 9
      %p261 = pnand %p259, %p260
      %p262 = pneg %p261
      // Predicated region
      $region37: #{tpu_custom_call.1} parent=5 // pred_check
        _
      $region38: #{tpu_custom_call.1} parent=5 // pred_check_branch
        %264 = sbr.rel (%p261) target = $region40
      $region39: #{tpu_custom_call.1} parent=5 // pred_region
        %s265 = ssub.s32 %s17, 1
        %s266 = sand.u32 %s100, 1
        %s267 = scalar_lea.sflag [#allocation3], %s266
        %s268 = sand.u32 %s100, 1
        %s269 = smul.addr %s268, 8
        %s270 = scalar_lea.vmem [#allocation2], %s269
        // Predicated region
        $region41: #{tpu_custom_call.1} parent=39 // pred_check
          %p271 = pneg %p113
        $region42: #{tpu_custom_call.1} parent=39 // pred_check_branch
          %273 = sbr.rel (%p271) target = $region44
        $region43: #{tpu_custom_call.1} parent=39 // pred_region
          %274 = dma.done %s267, 128
        $region44: #{tpu_custom_call.1} parent=39 // pred_fallthru
          _
        %p275 = scmp.lt.s32.totalorder %s26, 1
        %s276 = scalar_select %p275, %s26, 1
        %p277 = scmp.lt.s32.totalorder %s27, 3
        %s278 = scalar_select %p277, %s27, 3
        %s279 = smul.addr %s276, 4
        %s280 = sadd.s32 %s278, %s279
        %s281 = smul.addr %s280, 8
        %s282 = scalar_lea.vmem %s0, %s281
        %p283 = pneg %p57
        %p284 = pneg %p54
        %p285 = scmp.lt.s32.totalorder %s26, 1
        %s286 = scalar_select %p285, %s26, 1
        %p287 = scmp.lt.s32.totalorder %s27, 3
        %s288 = scalar_select %p287, %s27, 3
        %s289 = smul.addr %s286, 4
        %s290 = sadd.s32 %s288, %s289
        %s291 = smul.addr %s290, 8
        %s292 = scalar_lea.vmem %s1, %s291
        %p293 = pneg %p85
        %p294 = pneg %p82
        %s295 = sand.u32 %s100, 1
        %s296 = scalar_lea.sflag [#allocation3], %s295
        %s297 = sand.u32 %s100, 1
        %s298 = smul.addr %s297, 8
        %s299 = scalar_lea.vmem [#allocation2], %s298
        %p300 = pneg %p113
        %p301 = pneg %p110
        %p302 = pneg %p134
        %p303 = pneg %p131
        %p304 = scmp.lt.s32.totalorder %s26, 1
        %s305 = scalar_select %p304, %s26, 1
        %s306 = smul.addr %s305, 8
        %s307 = scalar_lea.vmem %s4, %s306
        %p308 = pneg %p160
        %p309 = pneg %p157
        %p310 = pneg %p188
        %p311 = pneg %p185
        %s312 = sand.u32 %s175, 1
        %s313 = scalar_lea.sflag [#allocation4], %s312
        %s314 = sand.u32 %s175, 1
        %s315 = smul.addr %s314, 8
        %s316 = scalar_lea.vmem [#allocation5], %s315
        %p317 = scmp.lt.s32.totalorder %s26, 1
        %s318 = scalar_select %p317, %s26, 1
        %p319 = scmp.lt.s32.totalorder %s27, 3
        %s320 = scalar_select %p319, %s27, 3
        %s321 = smul.addr %s318, 4
        %s322 = sadd.s32 %s320, %s321
        %s323 = smul.addr %s322, 8
        %s324 = scalar_lea.vmem %s0, %s323
        %p325 = scmp.lt.s32.totalorder %s26, 1
        %s326 = scalar_select %p325, %s26, 1
        %p327 = scmp.lt.s32.totalorder %s27, 3
        %s328 = scalar_select %p327, %s27, 3
        %s329 = smul.addr %s326, 4
        %s330 = sadd.s32 %s328, %s329
        %s331 = smul.addr %s330, 8
        %s332 = scalar_lea.vmem %s1, %s331
        %p333 = scmp.lt.s32.totalorder %s26, 1
        %s334 = scalar_select %p333, %s26, 1
        %s335 = smul.addr %s334, 8
        %s336 = scalar_lea.vmem %s4, %s335
        %v337 = vld [vmem:[%s324] sm:$0xff]
        %v338 = vmul.f32 %v337, 0.17677669
        %v339 = vld [vmem:[%s332] sm:$0xff]
        %v340 = vld [vmem:[%s270] sm:$0xff]
        %v341 = vld [vmem:[%s3] sm:$0xff]
        %v342 = vld [vmem:[%s3 + $0x8] sm:$0xff]
        %v343 = vld [vmem:[%s3 + $0x10] sm:$0xff]
        %v344 = vld [vmem:[%s3 + $0x18] sm:$0xff]
        %v345 = vld [vmem:[%s3 + $0x20] sm:$0xff]
        %v346 = vld [vmem:[%s3 + $0x28] sm:$0xff]
        %v347 = vld [vmem:[%s3 + $0x30] sm:$0xff]
        %v348 = vld [vmem:[%s3 + $0x38] sm:$0xff]
        %v349 = vld [vmem:[%s3 + $0x40] sm:$0xff]
        %v350 = vld [vmem:[%s3 + $0x48] sm:$0xff]
        %v351 = vld [vmem:[%s3 + $0x50] sm:$0xff]
        %v352 = vld [vmem:[%s3 + $0x58] sm:$0xff]
        %v353 = vld [vmem:[%s3 + $0x60] sm:$0xff]
        %v354 = vld [vmem:[%s3 + $0x68] sm:$0xff]
        %v355 = vld [vmem:[%s3 + $0x70] sm:$0xff]
        %v356 = vld [vmem:[%s3 + $0x78] sm:$0xff]
        %v357 = vld [vmem:[%s336] sm:$0xff]
        %vm358 = vcmask 261120
        %v360 = vsel %vm358, %v338, 0
        %v363 = vsel %vm358, %v341, 0
        %v366 = vsel %vm358, %v342, 0
        %v369 = vsel %vm358, %v343, 0
        %v372 = vsel %vm358, %v344, 0
        %v375 = vsel %vm358, %v345, 0
        %v378 = vsel %vm358, %v346, 0
        %v381 = vsel %vm358, %v347, 0
        %v384 = vsel %vm358, %v348, 0
        %v387 = vsel %vm358, %v349, 0
        %v390 = vsel %vm358, %v350, 0
        %v393 = vsel %vm358, %v351, 0
        %v396 = vsel %vm358, %v352, 0
        %v399 = vsel %vm358, %v353, 0
        %v402 = vsel %vm358, %v354, 0
        %v405 = vsel %vm358, %v355, 0
        %v408 = vsel %vm358, %v356, 0
        %410 = vmatprep.subr.mxu0 0.0
        %411 = vmatpush1.xpose.msra.mxu0 %v408
        %412 = vmatprep.subr.mxu0 0.0
        %413 = vmatpush1.xpose.msra.mxu0 %v405
        %414 = vmatprep.subr.mxu0 0.0
        %415 = vmatpush1.xpose.msra.mxu0 %v402
        %416 = vmatprep.subr.mxu0 0.0
        %417 = vmatpush1.xpose.msra.mxu0 %v399
        %418 = vmatprep.subr.mxu0 0.0
        %419 = vmatpush1.xpose.msra.mxu0 %v396
        %420 = vmatprep.subr.mxu0 0.0
        %421 = vmatpush1.xpose.msra.mxu0 %v393
        %422 = vmatprep.subr.mxu0 0.0
        %423 = vmatpush1.xpose.msra.mxu0 %v390
        %424 = vmatprep.subr.mxu0 0.0
        %425 = vmatpush1.xpose.msra.mxu0 %v387
        %426 = vmatprep.subr.mxu0 0.0
        %427 = vmatpush1.xpose.msra.mxu0 %v384
        %428 = vmatprep.subr.mxu0 0.0
        %429 = vmatpush1.xpose.msra.mxu0 %v381
        %430 = vmatprep.subr.mxu0 0.0
        %431 = vmatpush1.xpose.msra.mxu0 %v378
        %432 = vmatprep.subr.mxu0 0.0
        %433 = vmatpush1.xpose.msra.mxu0 %v375
        %434 = vmatprep.subr.mxu0 0.0
        %435 = vmatpush1.xpose.msra.mxu0 %v372
        %436 = vmatprep.subr.mxu0 0.0
        %437 = vmatpush1.xpose.msra.mxu0 %v369
        %438 = vmatprep.subr.mxu0 0.0
        %439 = vmatpush1.xpose.msra.mxu0 %v366
        %440 = vmatprep.subr.mxu0 0.0
        %441 = vmatpush1.xpose.msra.mxu0 %v363
        %442 = vmatprep.subr.mxu0 0.0
        %443 = vmatpush2.xpose.msra.mxu0 0.0
        %444 = vmatprep.subr.mxu0 0.0
        %445 = vmatpush2.xpose.msra.mxu0 0.0
        %446 = vmatprep.subr.mxu0 0.0
        %447 = vmatpush2.xpose.msra.mxu0 0.0
        %448 = vmatprep.subr.mxu0 0.0
        %449 = vmatpush2.xpose.msra.mxu0 0.0
        %450 = vmatprep.subr.mxu0 0.0
        %451 = vmatpush2.xpose.msra.mxu0 0.0
        %452 = vmatprep.subr.mxu0 0.0
        %453 = vmatpush2.xpose.msra.mxu0 0.0
        %454 = vmatprep.subr.mxu0 0.0
        %455 = vmatpush2.xpose.msra.mxu0 0.0
        %456 = vmatprep.subr.mxu0 0.0
        %457 = vmatpush2.xpose.msra.mxu0 0.0
        %458 = vmatprep.subr.mxu0 0.0
        %459 = vmatpush2.xpose.msra.mxu0 0.0
        %460 = vmatprep.subr.mxu0 0.0
        %461 = vmatpush2.xpose.msra.mxu0 0.0
        %462 = vmatprep.subr.mxu0 0.0
        %463 = vmatpush2.xpose.msra.mxu0 0.0
        %464 = vmatprep.subr.mxu0 0.0
        %465 = vmatpush2.xpose.msra.mxu0 0.0
        %466 = vmatprep.subr.mxu0 0.0
        %467 = vmatpush2.xpose.msra.mxu0 0.0
        %468 = vmatprep.subr.mxu0 0.0
        %469 = vmatpush2.xpose.msra.mxu0 0.0
        %470 = vmatprep.subr.mxu0 0.0
        %471 = vmatpush2.xpose.msra.mxu0 0.0
        %472 = vmatprep.subr.mxu0 0.0
        %473 = vmatpush2.xpose.msra.mxu0 0.0
        %474 = vmatprep.mubr.f32.mxu0 0.0
        %475 = vmatmul.mubr.f32.gmra.mxu0 %v360
        %v476 = vpop.f32.mrf.mxu0
        %v477 = vadd.f32 0.0, %v476
        %v478 = vpop.f32.mrf.mxu0
        %479 = vdwg.mxu0
        %s481 = sor.u32 256, 121
        %482 = vrot.lane.b32.xlu0 %v477, %s481
        %v483 = vpop.permute.xlu0 %482
        %v485 = vsel %vm358, %v339, 0
        %487 = vmatprep.subr.mxu0 0.0
        %488 = vmatpush1.xpose.msra.mxu0 0.0
        %489 = vmatprep.subr.mxu0 0.0
        %490 = vmatpush1.xpose.msra.mxu0 0.0
        %491 = vmatprep.subr.mxu0 0.0
        %492 = vmatpush1.xpose.msra.mxu0 0.0
        %493 = vmatprep.subr.mxu0 0.0
        %494 = vmatpush1.xpose.msra.mxu0 0.0
        %495 = vmatprep.subr.mxu0 0.0
        %496 = vmatpush1.xpose.msra.mxu0 0.0
        %497 = vmatprep.subr.mxu0 0.0
        %498 = vmatpush1.xpose.msra.mxu0 0.0
        %499 = vmatprep.subr.mxu0 0.0
        %500 = vmatpush1.xpose.msra.mxu0 0.0
        %501 = vmatprep.subr.mxu0 0.0
        %502 = vmatpush1.xpose.msra.mxu0 0.0
        %503 = vmatprep.subr.mxu0 0.0
        %504 = vmatpush1.xpose.msra.mxu0 0.0
        %505 = vmatprep.subr.mxu0 0.0
        %506 = vmatpush1.xpose.msra.mxu0 0.0
        %507 = vmatprep.subr.mxu0 0.0
        %508 = vmatpush1.xpose.msra.mxu0 0.0
        %509 = vmatprep.subr.mxu0 0.0
        %510 = vmatpush1.xpose.msra.mxu0 0.0
        %511 = vmatprep.subr.mxu0 0.0
        %512 = vmatpush1.xpose.msra.mxu0 0.0
        %513 = vmatprep.subr.mxu0 0.0
        %514 = vmatpush1.xpose.msra.mxu0 0.0
        %515 = vmatprep.subr.mxu0 0.0
        %516 = vmatpush1.xpose.msra.mxu0 0.0
        %517 = vmatprep.subr.mxu0 0.0
        %518 = vmatpush1.xpose.msra.mxu0 %v485
        %519 = vmatprep.subr.mxu0 0.0
        %520 = vmatpush2.xpose.msra.mxu0 0.0
        %521 = vmatprep.subr.mxu0 0.0
        %522 = vmatpush2.xpose.msra.mxu0 0.0
        %523 = vmatprep.subr.mxu0 0.0
        %524 = vmatpush2.xpose.msra.mxu0 0.0
        %525 = vmatprep.subr.mxu0 0.0
        %526 = vmatpush2.xpose.msra.mxu0 0.0
        %527 = vmatprep.subr.mxu0 0.0
        %528 = vmatpush2.xpose.msra.mxu0 0.0
        %529 = vmatprep.subr.mxu0 0.0
        %530 = vmatpush2.xpose.msra.mxu0 0.0
        %531 = vmatprep.subr.mxu0 0.0
        %532 = vmatpush2.xpose.msra.mxu0 0.0
        %533 = vmatprep.subr.mxu0 0.0
        %534 = vmatpush2.xpose.msra.mxu0 0.0
        %535 = vmatprep.subr.mxu0 0.0
        %536 = vmatpush2.xpose.msra.mxu0 0.0
        %537 = vmatprep.subr.mxu0 0.0
        %538 = vmatpush2.xpose.msra.mxu0 0.0
        %539 = vmatprep.subr.mxu0 0.0
        %540 = vmatpush2.xpose.msra.mxu0 0.0
        %541 = vmatprep.subr.mxu0 0.0
        %542 = vmatpush2.xpose.msra.mxu0 0.0
        %543 = vmatprep.subr.mxu0 0.0
        %544 = vmatpush2.xpose.msra.mxu0 0.0
        %545 = vmatprep.subr.mxu0 0.0
        %546 = vmatpush2.xpose.msra.mxu0 0.0
        %547 = vmatprep.subr.mxu0 0.0
        %548 = vmatpush2.xpose.msra.mxu0 0.0
        %549 = vmatprep.subr.mxu0 0.0
        %550 = vmatpush2.xpose.msra.mxu0 0.0
        %551 = vmatprep.mubr.f32.mxu0 0.0
        %552 = vmatmul.mubr.f32.gmra.mxu0 %v360
        %v553 = vpop.f32.mrf.mxu0
        %v554 = vadd.f32 %v483, %v553
        %v555 = vpop.f32.mrf.mxu0
        %556 = vdwg.mxu0
        %v557 = vadd.f32 %v554, %v357
        %vm558 = vcmask 64512
        %v559 = vsel %vm558, %v557, -inf
        %560 = vmax.xlane.f32.xlu0 %v559
        %v561 = vpop.xlane.xlu0 %560
        %v562 = vsub.f32 %v557, %v561
        %v563 = vmul.f32 %v562, 1.442695
        %v564 = vpow.pop %v563
        %v565 = vsel %vm558, %v564, 0.0
        %566 = vadd.xlane.f32.xlu0 %v565
        %v567 = vpop.xlane.xlu0 %566
        %v568 = vrcp.pop %v567
        %v569 = vmul.f32 %v564, %v568
        %v571 = vsel %vm558, %v569, 0
        %573 = vmatprep.subr.mxu0 0.0
        %574 = vmatpush1.msra.mxu0 0.0
        %575 = vmatprep.subr.mxu0 0.0
        %576 = vmatpush1.msra.mxu0 0.0
        %577 = vmatprep.subr.mxu0 0.0
        %578 = vmatpush1.msra.mxu0 0.0
        %579 = vmatprep.subr.mxu0 0.0
        %580 = vmatpush1.msra.mxu0 0.0
        %581 = vmatprep.subr.mxu0 0.0
        %582 = vmatpush1.msra.mxu0 0.0
        %583 = vmatprep.subr.mxu0 0.0
        %584 = vmatpush1.msra.mxu0 0.0
        %585 = vmatprep.subr.mxu0 0.0
        %586 = vmatpush1.msra.mxu0 0.0
        %587 = vmatprep.subr.mxu0 0.0
        %588 = vmatpush1.msra.mxu0 0.0
        %589 = vmatprep.subr.mxu0 0.0
        %590 = vmatpush1.msra.mxu0 0.0
        %591 = vmatprep.subr.mxu0 0.0
        %592 = vmatpush1.msra.mxu0 0.0
        %593 = vmatprep.subr.mxu0 0.0
        %594 = vmatpush1.msra.mxu0 0.0
        %595 = vmatprep.subr.mxu0 0.0
        %596 = vmatpush1.msra.mxu0 0.0
        %597 = vmatprep.subr.mxu0 0.0
        %598 = vmatpush1.msra.mxu0 0.0
        %599 = vmatprep.subr.mxu0 0.0
        %600 = vmatpush1.msra.mxu0 0.0
        %601 = vmatprep.subr.mxu0 0.0
        %602 = vmatpush1.msra.mxu0 0.0
        %603 = vmatprep.subr.mxu0 0.0
        %604 = vmatpush1.msra.mxu0 %v340
        %605 = vmatprep.subr.mxu0 0.0
        %606 = vmatpush2.msra.mxu0 0.0
        %607 = vmatprep.subr.mxu0 0.0
        %608 = vmatpush2.msra.mxu0 0.0
        %609 = vmatprep.subr.mxu0 0.0
        %610 = vmatpush2.msra.mxu0 0.0
        %611 = vmatprep.subr.mxu0 0.0
        %612 = vmatpush2.msra.mxu0 0.0
        %613 = vmatprep.subr.mxu0 0.0
        %614 = vmatpush2.msra.mxu0 0.0
        %615 = vmatprep.subr.mxu0 0.0
        %616 = vmatpush2.msra.mxu0 0.0
        %617 = vmatprep.subr.mxu0 0.0
        %618 = vmatpush2.msra.mxu0 0.0
        %619 = vmatprep.subr.mxu0 0.0
        %620 = vmatpush2.msra.mxu0 0.0
        %621 = vmatprep.subr.mxu0 0.0
        %622 = vmatpush2.msra.mxu0 0.0
        %623 = vmatprep.subr.mxu0 0.0
        %624 = vmatpush2.msra.mxu0 0.0
        %625 = vmatprep.subr.mxu0 0.0
        %626 = vmatpush2.msra.mxu0 0.0
        %627 = vmatprep.subr.mxu0 0.0
        %628 = vmatpush2.msra.mxu0 0.0
        %629 = vmatprep.subr.mxu0 0.0
        %630 = vmatpush2.msra.mxu0 0.0
        %631 = vmatprep.subr.mxu0 0.0
        %632 = vmatpush2.msra.mxu0 0.0
        %633 = vmatprep.subr.mxu0 0.0
        %634 = vmatpush2.msra.mxu0 0.0
        %635 = vmatprep.subr.mxu0 0.0
        %636 = vmatpush2.msra.mxu0 0.0
        %637 = vmatprep.mubr.f32.mxu0 0.0
        %638 = vmatmul.mubr.f32.gmra.mxu0 %v571
        %v639 = vpop.f32.mrf.mxu0
        %v640 = vadd.f32 0.0, %v639
        %v641 = vpop.f32.mrf.mxu0
        %642 = vdwg.mxu0
        %643 = vst.msk [vmem:[%s316] sm:$0xff] %vm358, %v640
        %s644 = sand.u32 %s175, 1
        %s645 = scalar_lea.sflag [#allocation4], %s644
        %s646 = sand.u32 %s175, 1
        %s647 = smul.addr %s646, 8
        %s648 = scalar_lea.vmem [#allocation5], %s647
        // Predicated region
        $region45: #{tpu_custom_call.1} parent=39 // pred_check
          %p649 = pneg %p185
        $region46: #{tpu_custom_call.1} parent=39 // pred_check_branch
          %651 = sbr.rel (%p649) target = $region48
        $region47: #{tpu_custom_call.1} parent=39 // pred_region
          %s653 = ssub.s32 128, 128
          %654 = vsyncadd %s645, %s653
          %s655 = smul.addr %s26, 4
          %s656 = sadd.s32 %s27, %s655
          %s657 = smul.addr %s656, 128
          %s658 = scalar_lea.hbm %s5, %s657
          %s660 = sshll.u32 %s648, 4
          %s661 = int_to_ptr.vmem [resolvable:$true] %s660
          %663 = dma.vmem_to_hbm [thread:$0]  %s661, 128, %s658, %s645
        $region48: #{tpu_custom_call.1} parent=39 // pred_fallthru
          _
      $region40: #{tpu_custom_call.1} parent=5 // pred_fallthru
        _
      %p664 = scmp.le.s32.totalorder 2, %s17
      // Predicated region
      $region49: #{tpu_custom_call.1} parent=5 // pred_check
        %p665 = pneg %p664
      $region50: #{tpu_custom_call.1} parent=5 // pred_check_branch
        %667 = sbr.rel (%p665) target = $region52
      $region51: #{tpu_custom_call.1} parent=5 // pred_region
        %s668 = ssub.s32 %s17, 2
        // Predicated region
        $region53: #{tpu_custom_call.1} parent=51 // pred_check
          %p669 = pneg %p191
        $region54: #{tpu_custom_call.1} parent=51 // pred_check_branch
          %671 = sbr.rel (%p669) target = $region56
        $region55: #{tpu_custom_call.1} parent=51 // pred_region
          %s672 = sand.u32 %s176, 1
          %s673 = scalar_lea.sflag [#allocation4], %s672
          %s674 = sand.u32 %s176, 1
          %s675 = smul.addr %s674, 8
          %s676 = scalar_lea.vmem [#allocation5], %s675
          %677 = dma.done %s673, 128
        $region56: #{tpu_custom_call.1} parent=51 // pred_fallthru
          _
      $region52: #{tpu_custom_call.1} parent=5 // pred_fallthru
        _
    $region6: #{tpu_custom_call.1} parent=1 // loop_footer
      %s21 = sadd.s32 1, %s17
    $region7: #{tpu_custom_call.1} parent=1 // loop_footer_branch
      %16 = sbr.rel target = $region3
    $region8: #{tpu_custom_call.1} parent=1 // loop_exit
      _
    %678 = vsyncpa [#allocation3], 1
    %s679 = scalar_lea.sflag [#allocation3], 1
    %680 = vsyncpa %s679, 1
    %681 = vsyncpa [#allocation4], 1
    %s682 = scalar_lea.sflag [#allocation4], 1
    %683 = vsyncpa %s682, 1

</llo_original>
